<compile_context>
chip_gen: v5e
topology: v5e:2x2
jax: 0.10.0
libtpu: 0.0.40
codegen_flags: <defaults>
</compile_context>

<pallas_src>
import functools

import jax
import jax.numpy as jnp
from jax import lax
from jax.experimental import pallas as pl
from jax.experimental.pallas import tpu as pltpu

_BETA = 0.1
_HALF_OVER_BETA = 0.5 / _BETA  # 5.0
_HALF_BETA = 0.5 * _BETA       # 0.05


def _round_up(x, m):
    return ((x + m - 1) // m) * m


def _weighted_l1_kernel(x1_ref, x2_ref, out_ref, acc_ref, *,
                        B, S, TB, TS, w0, wstep, inv_bs,
                        need_row_mask, need_col_mask):
    bi = pl.program_id(0)
    si = pl.program_id(1)
    ns = pl.num_programs(1)

    # Reset the per-batch-tile vector accumulator at the start of each seq sweep.
    @pl.when(si == 0)
    def _():
        acc_ref[...] = jnp.zeros_like(acc_ref)

    # Upcast after the (native-dtype) load: halves HBM traffic for bf16 inputs.
    x1 = x1_ref[...].astype(jnp.float32)
    x2 = x2_ref[...].astype(jnp.float32)

    # Smooth-L1 (Huber) with beta=0.1, reduction='none'.
    d = x1 - x2
    ad = jnp.abs(d)
    loss = jnp.where(ad < _BETA, _HALF_OVER_BETA * d * d, ad - _HALF_BETA)

    # torch.linspace(S/5, 1, steps=S) evaluated at the global column index,
    # built from a cheap (1, TS) iota and broadcast into the multiply.
    col = si * TS + lax.broadcasted_iota(jnp.int32, (1, TS), 1)           # (1, TS)
    w = jnp.float32(w0) + col.astype(jnp.float32) * jnp.float32(wstep)    # (1, TS)

    weighted = loss * w                                                   # (TB, TS)

    # Edge masking (compile-time specialized away for tile-aligned shapes).
    # Kept as a true select so undefined padded data can never leak NaNs.
    if need_row_mask or need_col_mask:
        ok = None
        if need_col_mask:
            ok = col < S                                                  # (1, TS)
        if need_row_mask:
            row = bi * TB + lax.broadcasted_iota(jnp.int32, (TB, 1), 0)   # (TB, 1)
            row_ok = row < B
            ok = row_ok if ok is None else jnp.logical_and(ok, row_ok)
        weighted = jnp.where(ok, weighted, jnp.float32(0.0))

    # Fold the batch/sublane-group axis with pure VALU adds (sublane-aligned
    # static slices, no cross-lane traffic), then accumulate into VMEM.
    part = weighted[0:8, :]
    for g in range(1, TB // 8):
        part = part + weighted[g * 8:(g + 1) * 8, :]
    acc_ref[...] += part                                                  # (8, TS)

    # Epilogue, once per batch tile: fold lanes in 128-wide chunks (vreg adds
    # only) and emit a lane-dense (8, 128) partial, pre-scaled by 1/(B*S).
    @pl.when(si == ns - 1)
    def _():
        acc = acc_ref[...]
        folded = acc[:, 0:128]
        for t in range(1, TS // 128):
            folded = folded + acc[:, t * 128:(t + 1) * 128]
        out_ref[...] = folded * jnp.float32(inv_bs)


def weighted_l1(input1, input2):
    """Equivalent of weighted_l1.forward(input1, input2)."""
    assert input1.shape == input2.shape and input1.ndim == 2
    B, S = input1.shape

    # linspace parameters (baked as compile-time constants; weight built in-kernel).
    w0 = S / 5.0
    wstep = 0.0 if S == 1 else (1.0 - w0) / (S - 1)

    itemsize = jnp.dtype(input1.dtype).itemsize
    S_pad = _round_up(S, 128)
    B_pad = _round_up(B, 8)

    # Prefer full-row (contiguous-HBM) tiles; budget ~2 MiB per input buffer so
    # 2 inputs x 2 pipeline buffers <= ~8 MiB (headroom under v5e's 16 MiB scoped
    # VMEM default and v7x's smaller physical VMEM).
    per_buf_budget = 2 * 1024 * 1024
    ts_cap = 4096 if itemsize <= 2 else 2048
    TS = min(S_pad, ts_cap)
    max_tb = max(8, ((per_buf_budget // (TS * itemsize)) // 8) * 8)
    TB = min(B_pad, 512, max_tb)

    nb = pl.cdiv(B, TB)
    ns = pl.cdiv(S, TS)
    grid = (nb, ns)

    need_row_mask = (B % TB) != 0
    need_col_mask = (S % TS) != 0

    kernel = functools.partial(
        _weighted_l1_kernel, B=B, S=S, TB=TB, TS=TS, w0=w0, wstep=wstep,
        inv_bs=1.0 / (B * S),
        need_row_mask=need_row_mask, need_col_mask=need_col_mask,
    )

    cost = pl.CostEstimate(
        flops=10 * B * S,
        transcendentals=0,
        bytes_accessed=2 * B * S * itemsize + nb * 8 * 128 * 4,
    )

    # NOTE: if xprof ever shows exposed DMA at tile boundaries, sweep
    # pipeline_mode=pl.Buffered(3) on the two input BlockSpecs.
    partials = pl.pallas_call(
        kernel,
        out_shape=jax.ShapeDtypeStruct((nb * 8, 128), jnp.float32),
        grid=grid,
        in_specs=[
            pl.BlockSpec((TB, TS), lambda i, j: (i, j)),  # input1 tile
            pl.BlockSpec((TB, TS), lambda i, j: (i, j)),  # input2 tile
        ],
        out_specs=pl.BlockSpec((8, 128), lambda i, j: (i, 0)),  # per-batch-tile partial
        scratch_shapes=[pltpu.VMEM((8, TS), jnp.float32)],       # vector accumulator
        compiler_params=pltpu.CompilerParams(
            dimension_semantics=("parallel", "arbitrary"),       # megacore on v7x
        ),
        cost_estimate=cost,
    )(input1, input2)

    # Tiny final reduction over nb*8*128 pre-scaled partials.
    return jnp.sum(partials)


def _reference(input1, input2):
    S = input1.shape[1]
    w = jnp.linspace(S / 5.0, 1.0, S, dtype=jnp.float32)
    x1 = input1.astype(jnp.float32)
    x2 = input2.astype(jnp.float32)
    d = x1 - x2
    ad = jnp.abs(d)
    loss = jnp.where(ad < _BETA, 0.5 * d * d / _BETA, ad - 0.5 * _BETA)
    return jnp.mean(loss * w)


if __name__ == "__main__":
    key = jax.random.PRNGKey(0)
    k1, k2 = jax.random.split(key)

    # Small shapes consistent with (batch, seq_len).
    B, S = 2, 8
    x1 = jax.random.normal(k1, (B, S), dtype=jnp.float32)
    x2 = jax.random.normal(k2, (B, S), dtype=jnp.float32)

    result = weighted_l1(x1, x2)
    jax.block_until_ready(result)
    ref = _reference(x1, x2)
    assert jnp.allclose(result, ref, rtol=1e-5, atol=1e-6), (result, ref)

    # Non-tile-aligned, bf16 case (exercises the masked path + native-dtype stream).
    B2, S2 = 13, 200
    y1 = jax.random.normal(k1, (B2, S2), dtype=jnp.bfloat16)
    y2 = jax.random.normal(k2, (B2, S2), dtype=jnp.bfloat16)
    result2 = weighted_l1(y1, y2)
    jax.block_until_ready(result2)
    ref2 = _reference(y1, y2)
    assert jnp.allclose(result2, ref2, rtol=1e-3, atol=1e-4), (result2, ref2)

    print("KERNEL_OK")
</pallas_src>

<mosaic_0001>
module attributes {stable_mosaic.version = 11 : i64} {
  func.func @_weighted_l1_kernel(%arg0: i32, %arg1: i32, %arg2: memref<8x128xf32, #tpu.memory_space<vmem>>, %arg3: memref<8x128xf32, #tpu.memory_space<vmem>>, %arg4: memref<8x128xf32, #tpu.memory_space<vmem>>, %arg5: memref<8x128xf32, #tpu.memory_space<vmem>>) attributes {dimension_semantics = [#tpu.dimension_semantics<parallel>, #tpu.dimension_semantics<arbitrary>], iteration_bounds = array<i64: 1, 1>, scalar_prefetch = 0 : i64, scratch_operands = 1 : i64, tpu.core_type = #tpu.core_type<tc>, window_params = [{transform_indices = @transform_0, window_bounds = array<i64: 8, 128>}, {transform_indices = @transform_1, window_bounds = array<i64: 8, 128>}, {transform_indices = @transform_2, window_bounds = array<i64: 8, 128>}]} {
    %c0_i32 = arith.constant 0 : i32
    %0 = arith.cmpi eq, %arg1, %c0_i32 : i32
    %1 = arith.extui %0 : i1 to i32
    %c0_i32_0 = arith.constant 0 : i32
    %2 = arith.cmpi ne, %1, %c0_i32_0 : i32
    scf.if %2 {
      %cst_16 = arith.constant 0.000000e+00 : f32
      %45 = vector.broadcast %cst_16 : f32 to vector<8x128xf32>
      %c0_17 = arith.constant 0 : index
      %c0_18 = arith.constant 0 : index
      %46 = vector.load %arg5[%c0_17, %c0_18] : memref<8x128xf32, #tpu.memory_space<vmem>>, vector<8x128xf32>
      tpu.vector_store %arg5[%c0_17, %c0_18], %45 {strides = array<i32>} : memref<8x128xf32, #tpu.memory_space<vmem>>, vector<8x128xf32>,
    } else {
    }
    %c0 = arith.constant 0 : index
    %c0_1 = arith.constant 0 : index
    %3 = vector.load %arg2[%c0, %c0_1] : memref<8x128xf32, #tpu.memory_space<vmem>>, vector<8x128xf32>
    %c0_2 = arith.constant 0 : index
    %c0_3 = arith.constant 0 : index
    %4 = vector.load %arg3[%c0_2, %c0_3] : memref<8x128xf32, #tpu.memory_space<vmem>>, vector<8x128xf32>
    %5 = arith.subf %3, %4 : vector<8x128xf32>
    %6 = math.absf %5 : vector<8x128xf32>
    %cst = arith.constant 1.000000e-01 : f32
    %7 = vector.broadcast %cst : f32 to vector<8x128xf32>
    %8 = arith.cmpf olt, %6, %7 : vector<8x128xf32>
    %cst_4 = arith.constant 5.000000e+00 : f32
    %9 = vector.broadcast %cst_4 : f32 to vector<8x128xf32>
    %10 = arith.mulf %9, %5 : vector<8x128xf32>
    %11 = arith.mulf %10, %5 : vector<8x128xf32>
    %cst_5 = arith.constant 5.000000e-02 : f32
    %12 = vector.broadcast %cst_5 : f32 to vector<8x128xf32>
    %13 = arith.subf %6, %12 : vector<8x128xf32>
    %14 = arith.select %8, %11, %13 : vector<8x128xi1>, vector<8x128xf32>
    %c128_i32 = arith.constant 128 : i32
    %15 = arith.muli %arg1, %c128_i32 : i32
    %16 = tpu.iota {dimensions = array<i32: 1>} : vector<1x128xi32>
    %17 = vector.broadcast %15 : i32 to vector<1x128xi32>
    %18 = arith.addi %17, %16 : vector<1x128xi32>
    %19 = arith.sitofp %18 : vector<1x128xi32> to vector<1x128xf32>
    %cst_6 = arith.constant -0.085714288 : f32
    %20 = vector.broadcast %cst_6 : f32 to vector<1x128xf32>
    %21 = arith.mulf %19, %20 : vector<1x128xf32>
    %cst_7 = arith.constant 1.600000e+00 : f32
    %22 = vector.broadcast %cst_7 : f32 to vector<1x128xf32>
    %23 = arith.addf %22, %21 : vector<1x128xf32>
    %24 = vector.broadcast %23 : vector<1x128xf32> to vector<8x128xf32>
    %25 = arith.mulf %14, %24 : vector<8x128xf32>
    %c8_i32 = arith.constant 8 : i32
    %26 = vector.broadcast %c8_i32 : i32 to vector<1x128xi32>
    %27 = arith.cmpi slt, %18, %26 : vector<1x128xi32>
    %c8_i32_8 = arith.constant 8 : i32
    %28 = arith.muli %arg0, %c8_i32_8 : i32
    %29 = tpu.iota {dimensions = array<i32: 0>} : vector<8x1xi32>
    %30 = vector.broadcast %28 : i32 to vector<8x1xi32>
    %31 = arith.addi %30, %29 : vector<8x1xi32>
    %c2_i32 = arith.constant 2 : i32
    %32 = vector.broadcast %c2_i32 : i32 to vector<8x1xi32>
    %33 = arith.cmpi slt, %31, %32 : vector<8x1xi32>
    %34 = vector.broadcast %27 : vector<1x128xi1> to vector<8x128xi1>
    %35 = vector.broadcast %33 : vector<8x1xi1> to vector<8x128xi1>
    %36 = arith.andi %34, %35 : vector<8x128xi1>
    %cst_9 = arith.constant 0.000000e+00 : f32
    %37 = vector.broadcast %cst_9 : f32 to vector<8x128xf32>
    %38 = arith.select %36, %25, %37 : vector<8x128xi1>, vector<8x128xf32>
    %c0_10 = arith.constant 0 : index
    %c0_11 = arith.constant 0 : index
    %39 = vector.load %arg5[%c0_10, %c0_11] : memref<8x128xf32, #tpu.memory_space<vmem>>, vector<8x128xf32>
    %40 = arith.addf %39, %38 : vector<8x128xf32>
    %c0_12 = arith.constant 0 : index
    %c0_13 = arith.constant 0 : index
    %41 = vector.load %arg5[%c0_12, %c0_13] : memref<8x128xf32, #tpu.memory_space<vmem>>, vector<8x128xf32>
    tpu.vector_store %arg5[%c0_12, %c0_13], %40 {strides = array<i32>} : memref<8x128xf32, #tpu.memory_space<vmem>>, vector<8x128xf32>,
    %c0_i32_14 = arith.constant 0 : i32
    %42 = arith.cmpi eq, %arg1, %c0_i32_14 : i32
    %43 = arith.extui %42 : i1 to i32
    %c0_i32_15 = arith.constant 0 : i32
    %44 = arith.cmpi ne, %43, %c0_i32_15 : i32
    scf.if %44 {
      %c0_16 = arith.constant 0 : index
      %c0_17 = arith.constant 0 : index
      %45 = vector.load %arg5[%c0_16, %c0_17] : memref<8x128xf32, #tpu.memory_space<vmem>>, vector<8x128xf32>
      %cst_18 = arith.constant 6.250000e-02 : f32
      %46 = vector.broadcast %cst_18 : f32 to vector<8x128xf32>
      %47 = arith.mulf %45, %46 : vector<8x128xf32>
      %c0_19 = arith.constant 0 : index
      %c0_20 = arith.constant 0 : index
      %48 = vector.load %arg4[%c0_19, %c0_20] : memref<8x128xf32, #tpu.memory_space<vmem>>, vector<8x128xf32>
      tpu.vector_store %arg4[%c0_19, %c0_20], %47 {strides = array<i32>} : memref<8x128xf32, #tpu.memory_space<vmem>>, vector<8x128xf32>,
    } else {
    }
    return
  }
  func.func @transform_0(%arg0: i32, %arg1: i32) -> (i32, i32) {
    %c0_i32 = arith.constant 0 : i32
    return %arg0, %arg1 : i32, i32
  }
  func.func @transform_1(%arg0: i32, %arg1: i32) -> (i32, i32) {
    %c0_i32 = arith.constant 0 : i32
    return %arg0, %arg1 : i32, i32
  }
  func.func @transform_2(%arg0: i32, %arg1: i32) -> (i32, i32) {
    %c0_i32 = arith.constant 0 : i32
    %c0_i32_0 = arith.constant 0 : i32
    return %arg0, %c0_i32 : i32, i32
  }
}

</mosaic_0001>

<llo_original>
// kernel: tpu_custom_call.1
$region0: #{tpu_custom_call.1}
  #allocation0 [shape = 'u32[]', space=smem, size = 0x4, offset = 0x4, fixed_abs, tag = 'smem constant byte address 0x4 - core index']
  #allocation1 [shape = 'u32[72,128]{1,0:T(1,128)}', space=vmem, size = 0x9000, scoped, tag = 'internal scratch']
  #allocation2 [shape = 'f32[8,128]{1,0:T(8,128)}', space=vmem, size = 0x1000, scoped, tag = 'scratch operand']
  %s0 = inlined_call_operand.hbm [shape: f32[2,8], index: 0, kind: input, shape index: {}]
  %s1 = inlined_call_operand.hbm [shape: f32[2,8], index: 1, kind: input, shape index: {}]
  %s2 = inlined_call_operand.hbm [shape: f32[8,128], index: 2, kind: output, shape index: {}]
  %s3 = sld [smem:[#allocation0]]
  $region34: #{tpu_custom_call.1} parent=0
    _
  %s5 = ssub.s32 1, %s3
  %s6 = scalar_select 0, %s5, %s3
  $region1: #{tpu_custom_call.1} parent=0
    #allocation3 [shape = 'u8[4096]{0}', space=vmem, size = 0x1000, scoped, tag = 'input window, operand 0, single buffered']
    #allocation4 [shape = 's32[1]{0}', space=sflag, size = 0x4, scoped, tag = 'scoped memory for tpu_custom_call.1']
    #allocation5 [shape = 's32[1]{0}', space=sflag, size = 0x4, scoped, tag = 'scoped memory for tpu_custom_call.1']
    #allocation6 [shape = 'u8[4096]{0}', space=vmem, size = 0x1000, scoped, tag = 'input window, operand 1, single buffered']
    #allocation7 [shape = 's32[1]{0}', space=sflag, size = 0x4, scoped, tag = 'scoped memory for tpu_custom_call.1']
    #allocation8 [shape = 'u8[4096]{0}', space=vmem, size = 0x1000, scoped, tag = 'output window, operand 0, single buffered']
    %7 = vsyncpa [#allocation4], 0
    %8 = vsyncpa [#allocation7], 0
    %9 = vsyncpa [#allocation5], 0
    // Predicated region
    $region2: #{tpu_custom_call.1} parent=1 // pred_check
      _
    $region3: #{tpu_custom_call.1} parent=1 // pred_check_branch
      %11 = sbr.rel (0) target = $region5
    $region4: #{tpu_custom_call.1} parent=1 // pred_region
      %13 = vsyncadd [#allocation4], 96
      %s14 = sshll.u32 %s0, 4
      %s15 = int_to_ptr.hbm [resolvable:$true] %s14
      %s16 = sshll.u32 [#allocation3], 4
      %s17 = int_to_ptr.vmem [resolvable:$true] %s16
      %22 = dma.hbm_to_vmem [thread:$0]  %s15, 32, %s17, [#allocation4], 32, 32, 2
    $region5: #{tpu_custom_call.1} parent=1 // pred_fallthru
      _
    // Predicated region
    $region6: #{tpu_custom_call.1} parent=1 // pred_check
      _
    $region7: #{tpu_custom_call.1} parent=1 // pred_check_branch
      %24 = sbr.rel (0) target = $region9
    $region8: #{tpu_custom_call.1} parent=1 // pred_region
      %26 = vsyncadd [#allocation7], 96
      %s27 = sshll.u32 %s1, 4
      %s28 = int_to_ptr.hbm [resolvable:$true] %s27
      %s29 = sshll.u32 [#allocation6], 4
      %s30 = int_to_ptr.vmem [resolvable:$true] %s29
      %35 = dma.hbm_to_vmem [thread:$0]  %s28, 32, %s30, [#allocation7], 32, 32, 2
    $region9: #{tpu_custom_call.1} parent=1 // pred_fallthru
      _
    // Predicated region
    $region10: #{tpu_custom_call.1} parent=1 // pred_check
      _
    $region11: #{tpu_custom_call.1} parent=1 // pred_check_branch
      %37 = sbr.rel (0) target = $region13
    $region12: #{tpu_custom_call.1} parent=1 // pred_region
      %39 = dma.done [#allocation4], 128
    $region13: #{tpu_custom_call.1} parent=1 // pred_fallthru
      _
    // Predicated region
    $region14: #{tpu_custom_call.1} parent=1 // pred_check
      _
    $region15: #{tpu_custom_call.1} parent=1 // pred_check_branch
      %41 = sbr.rel (0) target = $region17
    $region16: #{tpu_custom_call.1} parent=1 // pred_region
      %43 = dma.done [#allocation7], 128
    $region17: #{tpu_custom_call.1} parent=1 // pred_fallthru
      _
    %p44 = scmp.eq.s32.totalorder 0, 0
    // Predicated region
    $region18: #{tpu_custom_call.1} parent=1 // pred_check
      %p45 = pneg %p44
    $region19: #{tpu_custom_call.1} parent=1 // pred_check_branch
      %47 = sbr.rel (%p45) target = $region21
    $region20: #{tpu_custom_call.1} parent=1 // pred_region
      %48 = vst [vmem:[#allocation2] sm:$0xff] 0.0
    $region21: #{tpu_custom_call.1} parent=1 // pred_fallthru
      _
    %v49 = vld [vmem:[#allocation3] sm:$0xff]
    %v50 = vld [vmem:[#allocation6] sm:$0xff]
    %v51 = vsub.f32 %v49, %v50
    %v52 = vand.u32 2147483647, %v51
    %vm53 = vcmp.lt.f32.partialorder %v52, 0.1
    %v54 = vmul.f32 %v51, 5.0
    %v55 = vmul.f32 %v54, %v51
    %v56 = vsub.f32 %v52, 0.05
    %v57 = vsel %vm53, %v55, %v56
    %s58 = smul.u32 0, 128
    %v59 = vlaneseq
    %v60 = vand.u32 %v59, 127
    %v61 = vstv %s58
    %v62 = vadd.s32 %v61, %v60
    %v63 = vcvt.s32.f32 %v62
    %v64 = vmul.f32 %v63, -0.08571429
    %v65 = vadd.f32 %v64, 1.6
    %v66 = vmul.f32 %v57, %v65
    %vm67 = vcmp.lt.s32.totalorder %v62, 8
    %s68 = smul.u32 0, 8
    %v69 = vlaneseq
    %v70 = vshrl.u32 %v69, 7
    %v71 = vstv %s68
    %v72 = vadd.s32 %v71, %v70
    %vm73 = vcmp.lt.s32.totalorder %v72, 2
    %v74 = vsel %vm67, 1, 0
    %vm75 = vcmp.eq.s32.totalorder %v74, 1
    %v76 = vsel %vm73, 1, 0
    %vm77 = vcmp.eq.s32.totalorder %v76, 1
    %vm78 = vmand %vm75, %vm77
    %v79 = vsel %vm78, %v66, 0.0
    %v80 = vld [vmem:[#allocation2] sm:$0xff]
    %v81 = vadd.f32 %v80, %v79
    %82 = vst [vmem:[#allocation2] sm:$0xff] %v81
    // Predicated region
    $region22: #{tpu_custom_call.1} parent=1 // pred_check
      %p83 = pneg %p44
    $region23: #{tpu_custom_call.1} parent=1 // pred_check_branch
      %85 = sbr.rel (%p83) target = $region25
    $region24: #{tpu_custom_call.1} parent=1 // pred_region
      %v86 = vld [vmem:[#allocation2] sm:$0xff]
      %v87 = vmul.f32 %v86, 0.0625
      %88 = vst [vmem:[#allocation8] sm:$0xff] %v87
    $region25: #{tpu_custom_call.1} parent=1 // pred_fallthru
      _
    // Predicated region
    $region26: #{tpu_custom_call.1} parent=1 // pred_check
      _
    $region27: #{tpu_custom_call.1} parent=1 // pred_check_branch
      %90 = sbr.rel (0) target = $region29
    $region28: #{tpu_custom_call.1} parent=1 // pred_region
      %92 = vsyncadd [#allocation5], 0
      %s94 = sshll.u32 [#allocation8], 4
      %s95 = int_to_ptr.vmem [resolvable:$true] %s94
      %s96 = sshll.u32 %s2, 4
      %s97 = int_to_ptr.hbm [resolvable:$true] %s96
      %99 = dma.vmem_to_hbm [thread:$0]  %s95, 128, %s97, [#allocation5]
    $region29: #{tpu_custom_call.1} parent=1 // pred_fallthru
      _
    // Predicated region
    $region30: #{tpu_custom_call.1} parent=1 // pred_check
      _
    $region31: #{tpu_custom_call.1} parent=1 // pred_check_branch
      %101 = sbr.rel (0) target = $region33
    $region32: #{tpu_custom_call.1} parent=1 // pred_region
      %103 = dma.done [#allocation5], 128
    $region33: #{tpu_custom_call.1} parent=1 // pred_fallthru
      _
    %104 = vsyncpa [#allocation4], 1
    %105 = vsyncpa [#allocation7], 1
    %106 = vsyncpa [#allocation5], 1

</llo_original>
